<compile_context>
chip_gen: v7x
topology: tpu7x:2x2x1
jax: 0.10.0
libtpu: 0.0.40
codegen_flags: <defaults>
</compile_context>

<pallas_src>
import jax
import jax.numpy as jnp
from jax.experimental import pallas as pl
from jax.experimental.pallas import tpu as pltpu


# ----------------------------------------------------------------------- generation-aware sizing

def _detect_vmem_capacity_bytes():
    try:
        info = pltpu.get_tpu_info()
        for attr in ("vmem_capacity_bytes", "vmem_size_bytes", "vmem_bytes"):
            cap = getattr(info, attr, None)
            if cap:
                return int(cap)
    except Exception:
        pass
    return 64 << 20  # conservative (v7x-class) fallback: safe on every generation


_VMEM_CAP = _detect_vmem_capacity_bytes()

if _VMEM_CAP <= (64 << 20):
    # v7x-class: 64 MiB VMEM per TensorCore. Leave headroom for double-buffered DMAs
    # and compiler temporaries; keep weight residency, TR and TH modest.
    _VMEM_LIMIT_CAP = 48 << 20
    _RESIDENT_WEIGHT_LIMIT = 20 << 20
    _INTERMEDIATE_LIMIT = 8 << 20
    _TH_CANDIDATES = (512, 256, 128)
    _LARGE_D_ROW_TILE = 256
else:
    # v5e / v6e: 128 MiB VMEM per TensorCore. Keep weights resident much longer (they
    # stream from HBM once per call) and let TH grow toward the 256-wide MXU.
    _VMEM_LIMIT_CAP = 96 << 20
    _RESIDENT_WEIGHT_LIMIT = 64 << 20
    _INTERMEDIATE_LIMIT = 12 << 20
    _TH_CANDIDATES = (1024, 512, 256, 128)
    _LARGE_D_ROW_TILE = 512


# ----------------------------------------------------------------------- Buffered(1) probe

_BUFFERED1_SUPPORTED = None


def _buffered1_supported():
    """One-time probe (compile + run a tiny kernel) for pl.Buffered(1) single-buffering
    of grid-invariant blocks. Avoids per-forward try/except double tracing and keeps
    real compile errors from being masked."""
    global _BUFFERED1_SUPPORTED
    if _BUFFERED1_SUPPORTED is not None:
        return _BUFFERED1_SUPPORTED
    try:
        def _probe_kernel(x_ref, w_ref, o_ref):
            o_ref[...] = jnp.dot(x_ref[...], w_ref[...],
                                 preferred_element_type=jnp.float32).astype(o_ref.dtype)

        out = pl.pallas_call(
            _probe_kernel,
            out_shape=jax.ShapeDtypeStruct((8, 128), jnp.float32),
            grid_spec=pltpu.PrefetchScalarGridSpec(
                num_scalar_prefetch=0,
                grid=(1,),
                in_specs=[pl.BlockSpec((8, 128), lambda i: (0, 0)),
                          pl.BlockSpec((128, 128), lambda i: (0, 0),
                                       pipeline_mode=pl.Buffered(1))],
                out_specs=pl.BlockSpec((8, 128), lambda i: (0, 0))),
        )(jnp.zeros((8, 128), jnp.float32), jnp.zeros((128, 128), jnp.float32))
        jax.block_until_ready(out)
        _BUFFERED1_SUPPORTED = True
    except Exception:
        _BUFFERED1_SUPPORTED = False
    return _BUFFERED1_SUPPORTED


# ----------------------------------------------------------------------- kernels

def _ffn_resident_kernel(x_ref, w1_ref, b1_ref, w2_ref, b2_ref, o_ref):
    # x_ref: (TR, D)   w1_ref/w2_ref: (D, D) resident   b1_ref/b2_ref: (1, D)   o_ref: (TR, D)
    x = x_ref[...].astype(w1_ref.dtype)                      # MXU operand dtype (bf16 or f32)
    h = jnp.dot(x, w1_ref[...], preferred_element_type=jnp.float32) + b1_ref[...]
    # dropout (eval mode) -> identity; activation: ReLU
    h = jnp.maximum(h, 0.0)
    y = jnp.dot(h.astype(w2_ref.dtype), w2_ref[...],
                preferred_element_type=jnp.float32) + b2_ref[...]
    # dropout (eval mode) -> identity
    o_ref[...] = y.astype(o_ref.dtype)


def _ffn_hidden_tiled_kernel_scratch(x_ref, w1_ref, b1_ref, w2_ref, b2_ref, o_ref, acc_ref):
    # x_ref: (TR, D)  w1_ref: (D, TH)  b1_ref: (1, TH)  w2_ref: (TH, D)  b2_ref: (1, D)
    # o_ref: (TR, D)  acc_ref: (TR, D) f32 scratch accumulator (used for non-f32 outputs).
    h_idx = pl.program_id(1)

    @pl.when(h_idx == 0)
    def _():
        acc_ref[...] = jnp.zeros_like(acc_ref)

    x = x_ref[...].astype(w1_ref.dtype)
    hblk = jnp.dot(x, w1_ref[...], preferred_element_type=jnp.float32) + b1_ref[...]
    hblk = jnp.maximum(hblk, 0.0)                            # dropout(eval)=id; ReLU
    acc_ref[...] += jnp.dot(hblk.astype(w2_ref.dtype), w2_ref[...],
                            preferred_element_type=jnp.float32)

    @pl.when(h_idx == pl.num_programs(1) - 1)
    def _():
        o_ref[...] = (acc_ref[...] + b2_ref[...]).astype(o_ref.dtype)   # dropout(eval)=id


def _ffn_hidden_tiled_kernel_inplace(x_ref, w1_ref, b1_ref, w2_ref, b2_ref, o_ref):
    # f32 output variant: o_ref is resident across the hidden axis (same block index
    # for every h) so we accumulate directly into it -- saves TR*D*4 bytes of scratch
    # and the final copy.
    h_idx = pl.program_id(1)

    x = x_ref[...].astype(w1_ref.dtype)
    hblk = jnp.dot(x, w1_ref[...], preferred_element_type=jnp.float32) + b1_ref[...]
    hblk = jnp.maximum(hblk, 0.0)                            # dropout(eval)=id; ReLU
    contrib = jnp.dot(hblk.astype(w2_ref.dtype), w2_ref[...],
                      preferred_element_type=jnp.float32)

    @pl.when(h_idx == 0)
    def _():
        o_ref[...] = contrib + b2_ref[...]                   # dropout(eval)=id

    @pl.when(h_idx > 0)
    def _():
        o_ref[...] += contrib


# ----------------------------------------------------------------------- sizing helpers

def _round_up(v, m):
    return (v + m - 1) // m * m


def prepare_params(w1, b1, w2, b2, param_dtype=jnp.bfloat16):
    """One-time parameter prep (call at load time, NOT per forward call).

    PyTorch nn.Linear stores W as [D_out, D_in]; pre-transpose to [D_in, D_out] and cast
    to the MXU compute dtype once, so the forward path never pays a per-call HBM
    transpose/cast. param_dtype=jnp.float32 gives an exact-f32 kernel; bf16 (default)
    halves weight DMA/VMEM and runs at bf16 MXU rate (f32 accumulation either way).
    Biases stay f32 (added to the f32 accumulator)."""
    return (jnp.asarray(w1).T.astype(param_dtype),
            jnp.asarray(b1).reshape(1, -1).astype(jnp.float32),
            jnp.asarray(w2).T.astype(param_dtype),
            jnp.asarray(b2).reshape(1, -1).astype(jnp.float32))


def _cost_estimate(rows, D, xbytes, wbytes, weight_passes=1):
    return pl.CostEstimate(
        flops=4 * rows * D * D,                              # two [rows,D]x[D,D] matmuls
        transcendentals=0,
        bytes_accessed=int(2 * rows * D * xbytes             # read x + write out
                           + weight_passes * 2 * D * D * wbytes   # weight (re-)streaming
                           + 2 * D * 4),                     # two biases
    )


def _vmem_limit(raw_bytes):
    return int(min(max(1.3 * raw_bytes + (2 << 20), 16 << 20), _VMEM_LIMIT_CAP))


def _resident_raw_bytes(tr, D, xbytes, wbytes, weight_bufs):
    return (weight_bufs * 2 * D * D * wbytes                 # W1^T + W2^T (1 or 2 buffers each)
            + 2 * 2 * tr * D * xbytes                        # x + out tiles, double-buffered
            + tr * D * (4 + 2 * wbytes)                      # f32 h + casts of x/h
            + 2 * 8 * D * 4 + (1 << 20))                     # biases (sublane-padded) + slack


def _tiled_raw_bytes(tr, th, D, xbytes, wbytes, use_scratch):
    return (2 * 2 * D * th * wbytes                          # W1/W2 blocks, double-buffered
            + 2 * 2 * tr * D * xbytes                        # x + out tiles, double-buffered
            + (tr * D * 4 if use_scratch else 0)             # f32 accumulator scratch
            + tr * th * (4 + wbytes)                         # f32 hblk + its cast
            + tr * D * wbytes                                # x cast
            + 2 * 8 * D * 4 + (1 << 20))                     # biases + slack


# ----------------------------------------------------------------------- pallas_call wrappers

def _ffn_resident(x2d, w1_t, b1_2d, w2_t, b2_2d, tr):
    rows_p, D = x2d.shape
    xbytes = x2d.dtype.itemsize
    wbytes = w1_t.dtype.itemsize
    const_kwargs = dict(pipeline_mode=pl.Buffered(1)) if _buffered1_supported() else {}
    weight_bufs = 1 if const_kwargs else 2
    raw = _resident_raw_bytes(tr, D, xbytes, wbytes, weight_bufs)

    return pl.pallas_call(
        _ffn_resident_kernel,
        out_shape=jax.ShapeDtypeStruct((rows_p, D), x2d.dtype),
        grid_spec=pltpu.PrefetchScalarGridSpec(
            num_scalar_prefetch=0,
            grid=(rows_p // tr,),
            in_specs=[
                pl.BlockSpec((tr, D), lambda i: (i, 0)),                   # x rows
                pl.BlockSpec((D, D), lambda i: (0, 0), **const_kwargs),    # W1^T (resident)
                pl.BlockSpec((1, D), lambda i: (0, 0), **const_kwargs),    # b1
                pl.BlockSpec((D, D), lambda i: (0, 0), **const_kwargs),    # W2^T (resident)
                pl.BlockSpec((1, D), lambda i: (0, 0), **const_kwargs),    # b2
            ],
            out_specs=pl.BlockSpec((tr, D), lambda i: (i, 0)),
        ),
        compiler_params=pltpu.CompilerParams(
            dimension_semantics=("parallel",),                # rows shard across TCs (v7x)
            vmem_limit_bytes=_vmem_limit(raw)),
        cost_estimate=_cost_estimate(rows_p, D, xbytes, wbytes, weight_passes=1),
    )(x2d, w1_t, b1_2d, w2_t, b2_2d)


def _ffn_hidden_tiled(x2d, w1_t, b1_2d, w2_t, b2_2d, tr, th):
    rows_p, D = x2d.shape
    xbytes = x2d.dtype.itemsize
    wbytes = w1_t.dtype.itemsize
    inplace = (x2d.dtype == jnp.float32)                      # accumulate directly into o_ref
    const_kwargs = dict(pipeline_mode=pl.Buffered(1)) if _buffered1_supported() else {}
    raw = _tiled_raw_bytes(tr, th, D, xbytes, wbytes, use_scratch=not inplace)

    kernel = _ffn_hidden_tiled_kernel_inplace if inplace else _ffn_hidden_tiled_kernel_scratch
    scratch_shapes = [] if inplace else [pltpu.VMEM((tr, D), jnp.float32)]

    # TODO(synk): for th == 128 on v5e, pre-tile W1^T into [D//th, D, th] at
    # prepare_params time so each (D, th) weight block is a unit-stride DMA.
    return pl.pallas_call(
        kernel,
        out_shape=jax.ShapeDtypeStruct((rows_p, D), x2d.dtype),
        grid_spec=pltpu.PrefetchScalarGridSpec(
            num_scalar_prefetch=0,
            grid=(rows_p // tr, D // th),                     # hidden (reduction) axis last
            in_specs=[
                pl.BlockSpec((tr, D), lambda i, h: (i, 0)),   # x rows (constant over h -> no re-DMA)
                pl.BlockSpec((D, th), lambda i, h: (0, h)),   # W1^T column block
                pl.BlockSpec((1, th), lambda i, h: (0, h)),   # b1 slice
                pl.BlockSpec((th, D), lambda i, h: (h, 0)),   # W2^T row block
                pl.BlockSpec((1, D), lambda i, h: (0, 0), **const_kwargs),   # b2 (grid-invariant)
            ],
            out_specs=pl.BlockSpec((tr, D), lambda i, h: (i, 0)),
            scratch_shapes=scratch_shapes,
        ),
        compiler_params=pltpu.CompilerParams(
            dimension_semantics=("parallel", "arbitrary"),
            vmem_limit_bytes=_vmem_limit(raw)),
        cost_estimate=_cost_estimate(rows_p, D, xbytes, wbytes,
                                     weight_passes=rows_p // tr),   # tiled path re-streams weights
    )(x2d, w1_t, b1_2d, w2_t, b2_2d)


def feedforward_pallas(x, params, *, row_tile=512, hidden_tile=None):
    """Fused FeedFoward forward pass (eval mode).

    x: [B, S, D] (f32 or bf16).
    params: output of prepare_params() -> (W1^T [D,D], b1 [1,D], W2^T [D,D], b2 [1,D]).
    row_tile: max rows of the flattened [B*S, D] view per grid step.
    hidden_tile: force the hidden-dim-tiled accumulator path with this tile (multiple
        of 128 dividing D); None -> auto (resident weights when they fit in VMEM).
    """
    w1_t, b1_2d, w2_t, b2_2d = params
    B, S, D = x.shape
    assert w1_t.shape == (D, D) and w2_t.shape == (D, D), "d_model mismatch"
    rows = B * S
    xbytes = x.dtype.itemsize
    wbytes = w1_t.dtype.itemsize

    # --- row tile: as big as allowed, but balanced and >= 2 tiles when rows > 8 so the
    # --- "parallel" axis can shard across both v7x TensorCores.
    cap_tr = min(row_tile, _LARGE_D_ROW_TILE) if D >= 4096 else row_tile
    tr = min(_round_up(cap_tr, 8), _round_up(rows, 8))
    n_tiles = max(1, -(-rows // tr))
    if rows > 8:
        n_tiles = max(n_tiles, 2)
    tr = _round_up(-(-rows // n_tiles), 8)

    # --- path selection --------------------------------------------------------------
    weight_bufs = 1 if _buffered1_supported() else 2
    can_tile = (D % 128 == 0)
    resident_weight_bytes = weight_bufs * 2 * D * D * wbytes
    use_tiled = (hidden_tile is not None) or (
        can_tile and resident_weight_bytes > _RESIDENT_WEIGHT_LIMIT)

    if not use_tiled and tr * D * (4 + 2 * wbytes) > _INTERMEDIATE_LIMIT:
        # Resident-path f32 hidden intermediate too large: tile the hidden dim if we
        # can, otherwise shrink the row tile.
        if can_tile:
            use_tiled = True
        else:
            # TODO(synk): D not a multiple of 128 stays resident; pad the hidden dim at
            # prepare_params time if this ever still exceeds the VMEM budget.
            while tr > 128 and tr * D * (4 + 2 * wbytes) > _INTERMEDIATE_LIMIT:
                tr = max(128, _round_up(tr // 2, 8))

    # --- hidden tile for the tiled path ------------------------------------------------
    th = None
    if use_tiled:
        if hidden_tile is not None:
            th = hidden_tile
            assert D % th == 0 and th % 128 == 0, \
                "hidden_tile must be a multiple of 128 dividing d_model"
        else:
            th = 128
            use_scratch = (x.dtype != jnp.float32)
            for cand in _TH_CANDIDATES:
                if D % cand == 0 and _tiled_raw_bytes(
                        tr, cand, D, xbytes, wbytes, use_scratch) <= int(0.75 * _VMEM_LIMIT_CAP):
                    th = cand
                    break

    # --- pad rows to a tile multiple and run ------------------------------------------
    rows_p = _round_up(rows, tr)
    x2d = x.reshape(rows, D)
    if rows_p != rows:
        x2d = jnp.pad(x2d, ((0, rows_p - rows), (0, 0)))

    if use_tiled:
        out2d = _ffn_hidden_tiled(x2d, w1_t, b1_2d, w2_t, b2_2d, tr, th)
    else:
        out2d = _ffn_resident(x2d, w1_t, b1_2d, w2_t, b2_2d, tr)

    if rows_p != rows:
        out2d = out2d[:rows]
    return out2d.reshape(B, S, D)


# ----------------------------------------------------------------------- reference / test

def _reference(x, w1, b1, w2, b2):
    # PyTorch FeedFoward forward, eval mode (dropout = identity), f32 math.
    h = jnp.einsum("bsd,ed->bse", x, w1) + b1
    h = jnp.maximum(h, 0.0)
    return jnp.einsum("bsd,ed->bse", h, w2) + b2


def _make_inputs(key, B, S, D):
    kx, k1, k2, k3, k4 = jax.random.split(key, 5)
    bound = 1.0 / (D ** 0.5)  # PyTorch nn.Linear default init range
    x = jax.random.normal(kx, (B, S, D), dtype=jnp.float32)
    w1 = jax.random.uniform(k1, (D, D), minval=-bound, maxval=bound, dtype=jnp.float32)
    b1 = jax.random.uniform(k2, (D,), minval=-bound, maxval=bound, dtype=jnp.float32)
    w2 = jax.random.uniform(k3, (D, D), minval=-bound, maxval=bound, dtype=jnp.float32)
    b2 = jax.random.uniform(k4, (D,), minval=-bound, maxval=bound, dtype=jnp.float32)
    return x, w1, b1, w2, b2


if __name__ == "__main__":
    key = jax.random.PRNGKey(0)
    k_small, k_big = jax.random.split(key)

    # 1) Small shape, f32 params, resident-weight path: exact check vs f32 reference.
    B, S, D = 2, 8, 32
    x, w1, b1, w2, b2 = _make_inputs(k_small, B, S, D)
    ref = _reference(x, w1, b1, w2, b2)

    params_f32 = prepare_params(w1, b1, w2, b2, param_dtype=jnp.float32)
    out = jax.block_until_ready(feedforward_pallas(x, params_f32))
    assert out.shape == (B, S, D)
    assert jnp.allclose(out, ref, atol=1e-5, rtol=1e-5), "f32 resident path mismatch"

    # 2) Same shape, bf16 weights (production config): bf16-appropriate tolerance,
    #    f32 accumulation inside the kernel.
    params_bf16 = prepare_params(w1, b1, w2, b2, param_dtype=jnp.bfloat16)
    out_bf16 = jax.block_until_ready(feedforward_pallas(x, params_bf16))
    assert jnp.allclose(out_bf16, ref, atol=3e-2, rtol=3e-2), "bf16 resident path mismatch"

    # 3) d_model=256, hidden-dim-tiled path forced (hidden_tile=128), f32 output ->
    #    exercises the in-place accumulate-into-o_ref variant (needed for large d_model
    #    on v7x's 64 MiB VMEM).
    B2, S2, D2 = 2, 8, 256
    x2, w1b, b1b, w2b, b2b = _make_inputs(k_big, B2, S2, D2)
    ref2 = _reference(x2, w1b, b1b, w2b, b2b)
    params2 = prepare_params(w1b, b1b, w2b, b2b, param_dtype=jnp.bfloat16)
    out2 = jax.block_until_ready(feedforward_pallas(x2, params2, hidden_tile=128))
    assert out2.shape == (B2, S2, D2)
    assert jnp.allclose(out2, ref2, atol=3e-2, rtol=3e-2), "hidden-tiled (inplace) mismatch"

    # 4) Same shape, bf16 input, tiled path -> exercises the scratch-accumulator variant.
    x2_bf16 = x2.astype(jnp.bfloat16)
    out3 = jax.block_until_ready(feedforward_pallas(x2_bf16, params2, hidden_tile=128))
    assert out3.shape == (B2, S2, D2)
    assert jnp.allclose(out3.astype(jnp.float32), ref2, atol=6e-2, rtol=6e-2), \
        "hidden-tiled (scratch) mismatch"

    print("KERNEL_OK")
</pallas_src>

<mosaic_0001>
module attributes {stable_mosaic.version = 11 : i64} {
  func.func @_probe_kernel(%arg0: i32, %arg1: memref<8x128xf32, #tpu.memory_space<vmem>>, %arg2: memref<128x128xf32, #tpu.memory_space<vmem>>, %arg3: memref<8x128xf32, #tpu.memory_space<vmem>>) attributes {dimension_semantics = [#tpu.dimension_semantics<arbitrary>], iteration_bounds = array<i64: 1>, scalar_prefetch = 0 : i64, scratch_operands = 0 : i64, tpu.core_type = #tpu.core_type<tc>, window_params = [{pipeline_mode = #tpu.pipeline_mode<synchronous>, transform_indices = @transform_0, window_bounds = array<i64: 8, 128>}, {pipeline_mode = #tpu.pipeline_mode<synchronous>, transform_indices = @transform_1, window_bounds = array<i64: 128, 128>}, {pipeline_mode = #tpu.pipeline_mode<synchronous>, transform_indices = @transform_2, window_bounds = array<i64: 8, 128>}]} {
    %c0 = arith.constant 0 : index
    %c0_0 = arith.constant 0 : index
    %0 = vector.load %arg1[%c0, %c0_0] : memref<8x128xf32, #tpu.memory_space<vmem>>, vector<8x128xf32>
    %c0_1 = arith.constant 0 : index
    %c0_2 = arith.constant 0 : index
    %1 = vector.load %arg2[%c0_1, %c0_2] : memref<128x128xf32, #tpu.memory_space<vmem>>, vector<128x128xf32>
    %cst = arith.constant dense<0.000000e+00> : vector<8x128xf32>
    %2 = tpu.matmul %0, %1, %cst {dimension_numbers = #tpu.dot_dimension_numbers<[1], [0], [0], [1], [0, 0, 1, 1], [], []>} : vector<8x128xf32>, vector<128x128xf32>, vector<8x128xf32> -> vector<8x128xf32>
    %c0_3 = arith.constant 0 : index
    %c0_4 = arith.constant 0 : index
    %3 = vector.load %arg3[%c0_3, %c0_4] : memref<8x128xf32, #tpu.memory_space<vmem>>, vector<8x128xf32>
    tpu.vector_store %arg3[%c0_3, %c0_4], %2 {strides = array<i32>} : memref<8x128xf32, #tpu.memory_space<vmem>>, vector<8x128xf32>,
    return
  }
  func.func @transform_0(%arg0: i32) -> (i32, i32) {
    %c0_i32 = arith.constant 0 : i32
    %c0_i32_0 = arith.constant 0 : i32
    %c0_i32_1 = arith.constant 0 : i32
    return %c0_i32, %c0_i32_0 : i32, i32
  }
  func.func @transform_1(%arg0: i32) -> (i32, i32) {
    %c0_i32 = arith.constant 0 : i32
    %c0_i32_0 = arith.constant 0 : i32
    %c0_i32_1 = arith.constant 0 : i32
    return %c0_i32, %c0_i32_0 : i32, i32
  }
  func.func @transform_2(%arg0: i32) -> (i32, i32) {
    %c0_i32 = arith.constant 0 : i32
    %c0_i32_0 = arith.constant 0 : i32
    %c0_i32_1 = arith.constant 0 : i32
    return %c0_i32, %c0_i32_0 : i32, i32
  }
}

module attributes {stable_mosaic.version = 11 : i64} {
  func.func @_ffn_resident_kernel(%arg0: i32, %arg1: memref<8x32xf32, #tpu.memory_space<vmem>>, %arg2: memref<32x32xf32, #tpu.memory_space<vmem>>, %arg3: memref<1x32xf32, #tpu.memory_space<vmem>>, %arg4: memref<32x32xf32, #tpu.memory_space<vmem>>, %arg5: memref<1x32xf32, #tpu.memory_space<vmem>>, %arg6: memref<8x32xf32, #tpu.memory_space<vmem>>) attributes {dimension_semantics = [#tpu.dimension_semantics<parallel>], iteration_bounds = array<i64: 2>, scalar_prefetch = 0 : i64, scratch_operands = 0 : i64, tpu.core_type = #tpu.core_type<tc>, window_params = [{transform_indices = @transform_0, window_bounds = array<i64: 8, 32>}, {pipeline_mode = #tpu.pipeline_mode<synchronous>, transform_indices = @transform_1, window_bounds = array<i64: 32, 32>}, {pipeline_mode = #tpu.pipeline_mode<synchronous>, transform_indices = @transform_2, window_bounds = array<i64: 1, 32>}, {pipeline_mode = #tpu.pipeline_mode<synchronous>, transform_indices = @transform_3, window_bounds = array<i64: 32, 32>}, {pipeline_mode = #tpu.pipeline_mode<synchronous>, transform_indices = @transform_4, window_bounds = array<i64: 1, 32>}, {transform_indices = @transform_5, window_bounds = array<i64: 8, 32>}]} {
    %c0 = arith.constant 0 : index
    %c0_0 = arith.constant 0 : index
    %0 = vector.load %arg1[%c0, %c0_0] : memref<8x32xf32, #tpu.memory_space<vmem>>, vector<8x32xf32>
    %c0_1 = arith.constant 0 : index
    %c0_2 = arith.constant 0 : index
    %1 = vector.load %arg2[%c0_1, %c0_2] : memref<32x32xf32, #tpu.memory_space<vmem>>, vector<32x32xf32>
    %cst = arith.constant dense<0.000000e+00> : vector<8x32xf32>
    %2 = tpu.matmul %0, %1, %cst {dimension_numbers = #tpu.dot_dimension_numbers<[1], [0], [0], [1], [0, 0, 1, 1], [], []>} : vector<8x32xf32>, vector<32x32xf32>, vector<8x32xf32> -> vector<8x32xf32>
    %c0_3 = arith.constant 0 : index
    %c0_4 = arith.constant 0 : index
    %3 = vector.load %arg3[%c0_3, %c0_4] : memref<1x32xf32, #tpu.memory_space<vmem>>, vector<1x32xf32>
    %4 = vector.broadcast %3 : vector<1x32xf32> to vector<8x32xf32>
    %5 = arith.addf %2, %4 : vector<8x32xf32>
    %cst_5 = arith.constant 0.000000e+00 : f32
    %6 = vector.broadcast %cst_5 : f32 to vector<8x32xf32>
    %7 = arith.maximumf %5, %6 : vector<8x32xf32>
    %c0_6 = arith.constant 0 : index
    %c0_7 = arith.constant 0 : index
    %8 = vector.load %arg4[%c0_6, %c0_7] : memref<32x32xf32, #tpu.memory_space<vmem>>, vector<32x32xf32>
    %cst_8 = arith.constant dense<0.000000e+00> : vector<8x32xf32>
    %9 = tpu.matmul %7, %8, %cst_8 {dimension_numbers = #tpu.dot_dimension_numbers<[1], [0], [0], [1], [0, 0, 1, 1], [], []>} : vector<8x32xf32>, vector<32x32xf32>, vector<8x32xf32> -> vector<8x32xf32>
    %c0_9 = arith.constant 0 : index
    %c0_10 = arith.constant 0 : index
    %10 = vector.load %arg5[%c0_9, %c0_10] : memref<1x32xf32, #tpu.memory_space<vmem>>, vector<1x32xf32>
    %11 = vector.broadcast %10 : vector<1x32xf32> to vector<8x32xf32>
    %12 = arith.addf %9, %11 : vector<8x32xf32>
    %c0_11 = arith.constant 0 : index
    %c0_12 = arith.constant 0 : index
    %13 = vector.load %arg6[%c0_11, %c0_12] : memref<8x32xf32, #tpu.memory_space<vmem>>, vector<8x32xf32>
    tpu.vector_store %arg6[%c0_11, %c0_12], %12 {strides = array<i32>} : memref<8x32xf32, #tpu.memory_space<vmem>>, vector<8x32xf32>,
    return
  }
  func.func @transform_0(%arg0: i32) -> (i32, i32) {
    %c0_i32 = arith.constant 0 : i32
    %c0_i32_0 = arith.constant 0 : i32
    return %arg0, %c0_i32 : i32, i32
  }
  func.func @transform_1(%arg0: i32) -> (i32, i32) {
    %c0_i32 = arith.constant 0 : i32
    %c0_i32_0 = arith.constant 0 : i32
    %c0_i32_1 = arith.constant 0 : i32
    return %c0_i32, %c0_i32_0 : i32, i32
  }
  func.func @transform_2(%arg0: i32) -> (i32, i32) {
    %c0_i32 = arith.constant 0 : i32
    %c0_i32_0 = arith.constant 0 : i32
    %c0_i32_1 = arith.constant 0 : i32
    return %c0_i32, %c0_i32_0 : i32, i32
  }
  func.func @transform_3(%arg0: i32) -> (i32, i32) {
    %c0_i32 = arith.constant 0 : i32
    %c0_i32_0 = arith.constant 0 : i32
    %c0_i32_1 = arith.constant 0 : i32
    return %c0_i32, %c0_i32_0 : i32, i32
  }
  func.func @transform_4(%arg0: i32) -> (i32, i32) {
    %c0_i32 = arith.constant 0 : i32
    %c0_i32_0 = arith.constant 0 : i32
    %c0_i32_1 = arith.constant 0 : i32
    return %c0_i32, %c0_i32_0 : i32, i32
  }
  func.func @transform_5(%arg0: i32) -> (i32, i32) {
    %c0_i32 = arith.constant 0 : i32
    %c0_i32_0 = arith.constant 0 : i32
    return %arg0, %c0_i32 : i32, i32
  }
}

</mosaic_0001>

<llo_original>
// kernel: tpu_custom_call.1
$region0: #{tpu_custom_call.1}
  #allocation0 [shape = 'u32[]', space=smem, size = 0x4, offset = 0x4, fixed_abs, tag = 'smem constant byte address 0x4 - core index']
  #allocation1 [shape = 'u32[144,128]{1,0:T(1,128)}', space=vmem, size = 0x12000, scoped, tag = 'internal scratch']
  %s0 = inlined_call_operand.hbm [shape: f32[8,128], index: 0, kind: input, shape index: {}]
  %s1 = inlined_call_operand.hbm [shape: f32[128,128], index: 1, kind: input, shape index: {}]
  %s2 = inlined_call_operand.hbm [shape: f32[8,128], index: 2, kind: output, shape index: {}]
  %s3 = sld [smem:[#allocation0]]
  $region26: #{tpu_custom_call.1} parent=0
    _
  %s5 = ssub.s32 1, %s3
  %s6 = scalar_select 0, %s5, %s3
  $region1: #{tpu_custom_call.1} parent=0
    #allocation2 [shape = 'u8[4096]{0}', space=vmem, size = 0x1000, scoped, tag = 'input window, operand 0, single buffered']
    #allocation3 [shape = 's32[1]{0}', space=sflag, size = 0x4, scoped, tag = 'scoped memory for tpu_custom_call.1']
    #allocation4 [shape = 's32[1]{0}', space=sflag, size = 0x4, scoped, tag = 'scoped memory for tpu_custom_call.1']
    #allocation5 [shape = 'u8[65536]{0}', space=vmem, size = 0x10000, scoped, tag = 'input window, operand 1, single buffered']
    #allocation6 [shape = 's32[1]{0}', space=sflag, size = 0x4, scoped, tag = 'scoped memory for tpu_custom_call.1']
    #allocation7 [shape = 'u8[4096]{0}', space=vmem, size = 0x1000, scoped, tag = 'output window, operand 0, single buffered']
    %7 = vsyncpa [#allocation3], 0
    %8 = vsyncpa [#allocation6], 0
    %9 = vsyncpa [#allocation4], 0
    // Predicated region
    $region2: #{tpu_custom_call.1} parent=1 // pred_check
      _
    $region3: #{tpu_custom_call.1} parent=1 // pred_check_branch
      %11 = sbr.rel (0) target = $region5
    $region4: #{tpu_custom_call.1} parent=1 // pred_region
      %s13 = ssub.s32 128, 128
      %14 = vsyncadd [#allocation3], %s13
      %s16 = sshll.u32 [#allocation2], 4
      %s17 = int_to_ptr.vmem [resolvable:$true] %s16
      %19 = dma.hbm_to_vmem [thread:$0]  %s0, 128, %s17, [#allocation3]
    $region5: #{tpu_custom_call.1} parent=1 // pred_fallthru
      _
    // Predicated region
    $region6: #{tpu_custom_call.1} parent=1 // pred_check
      _
    $region7: #{tpu_custom_call.1} parent=1 // pred_check_branch
      %21 = sbr.rel (0) target = $region9
    $region8: #{tpu_custom_call.1} parent=1 // pred_region
      %s23 = ssub.s32 2048, 2048
      %24 = vsyncadd [#allocation6], %s23
      %s25 = sshll.u32 [#allocation5], 4
      %s26 = int_to_ptr.vmem [resolvable:$true] %s25
      %31 = dma.hbm_to_vmem [thread:$0]  %s1, 2048, %s26, [#allocation6], 128, 128, 8
    $region9: #{tpu_custom_call.1} parent=1 // pred_fallthru
      _
    // Predicated region
    $region10: #{tpu_custom_call.1} parent=1 // pred_check
      _
    $region11: #{tpu_custom_call.1} parent=1 // pred_check_branch
      %33 = sbr.rel (0) target = $region13
    $region12: #{tpu_custom_call.1} parent=1 // pred_region
      %34 = dma.done [#allocation3], 128
    $region13: #{tpu_custom_call.1} parent=1 // pred_fallthru
      _
    // Predicated region
    $region14: #{tpu_custom_call.1} parent=1 // pred_check
      _
    $region15: #{tpu_custom_call.1} parent=1 // pred_check_branch
      %36 = sbr.rel (0) target = $region17
    $region16: #{tpu_custom_call.1} parent=1 // pred_region
      %37 = dma.done [#allocation6], 2048
    $region17: #{tpu_custom_call.1} parent=1 // pred_fallthru
      _
    %v38 = vld [vmem:[#allocation2] sm:$0xff]
    %v39 = vld [vmem:[#allocation5] sm:$0xff]
    %v40 = vld [vmem:[#allocation5 + $0x8] sm:$0xff]
    %v41 = vld [vmem:[#allocation5 + $0x10] sm:$0xff]
    %v42 = vld [vmem:[#allocation5 + $0x18] sm:$0xff]
    %v43 = vld [vmem:[#allocation5 + $0x20] sm:$0xff]
    %v44 = vld [vmem:[#allocation5 + $0x28] sm:$0xff]
    %v45 = vld [vmem:[#allocation5 + $0x30] sm:$0xff]
    %v46 = vld [vmem:[#allocation5 + $0x38] sm:$0xff]
    %v47 = vld [vmem:[#allocation5 + $0x40] sm:$0xff]
    %v48 = vld [vmem:[#allocation5 + $0x48] sm:$0xff]
    %v49 = vld [vmem:[#allocation5 + $0x50] sm:$0xff]
    %v50 = vld [vmem:[#allocation5 + $0x58] sm:$0xff]
    %v51 = vld [vmem:[#allocation5 + $0x60] sm:$0xff]
    %v52 = vld [vmem:[#allocation5 + $0x68] sm:$0xff]
    %v53 = vld [vmem:[#allocation5 + $0x70] sm:$0xff]
    %v54 = vld [vmem:[#allocation5 + $0x78] sm:$0xff]
    %55 = vmatprep.subr.mxu0 0.0
    %56 = vmatpush1.msra.mxu0 %v39
    %57 = vmatprep.subr.mxu0 0.0
    %58 = vmatpush1.msra.mxu0 %v40
    %59 = vmatprep.subr.mxu0 0.0
    %60 = vmatpush1.msra.mxu0 %v41
    %61 = vmatprep.subr.mxu0 0.0
    %62 = vmatpush1.msra.mxu0 %v42
    %63 = vmatprep.subr.mxu0 0.0
    %64 = vmatpush1.msra.mxu0 %v43
    %65 = vmatprep.subr.mxu0 0.0
    %66 = vmatpush1.msra.mxu0 %v44
    %67 = vmatprep.subr.mxu0 0.0
    %68 = vmatpush1.msra.mxu0 %v45
    %69 = vmatprep.subr.mxu0 0.0
    %70 = vmatpush1.msra.mxu0 %v46
    %71 = vmatprep.subr.mxu0 0.0
    %72 = vmatpush1.msra.mxu0 %v47
    %73 = vmatprep.subr.mxu0 0.0
    %74 = vmatpush1.msra.mxu0 %v48
    %75 = vmatprep.subr.mxu0 0.0
    %76 = vmatpush1.msra.mxu0 %v49
    %77 = vmatprep.subr.mxu0 0.0
    %78 = vmatpush1.msra.mxu0 %v50
    %79 = vmatprep.subr.mxu0 0.0
    %80 = vmatpush1.msra.mxu0 %v51
    %81 = vmatprep.subr.mxu0 0.0
    %82 = vmatpush1.msra.mxu0 %v52
    %83 = vmatprep.subr.mxu0 0.0
    %84 = vmatpush1.msra.mxu0 %v53
    %85 = vmatprep.subr.mxu0 0.0
    %86 = vmatpush1.msra.mxu0 %v54
    %87 = vmatprep.subr.mxu0 0.0
    %88 = vmatpush1.msra.mxu0 0.0
    %89 = vmatprep.subr.mxu0 0.0
    %90 = vmatpush1.msra.mxu0 0.0
    %91 = vmatprep.subr.mxu0 0.0
    %92 = vmatpush1.msra.mxu0 0.0
    %93 = vmatprep.subr.mxu0 0.0
    %94 = vmatpush1.msra.mxu0 0.0
    %95 = vmatprep.subr.mxu0 0.0
    %96 = vmatpush1.msra.mxu0 0.0
    %97 = vmatprep.subr.mxu0 0.0
    %98 = vmatpush1.msra.mxu0 0.0
    %99 = vmatprep.subr.mxu0 0.0
    %100 = vmatpush1.msra.mxu0 0.0
    %101 = vmatprep.subr.mxu0 0.0
    %102 = vmatpush1.msra.mxu0 0.0
    %103 = vmatprep.subr.mxu0 0.0
    %104 = vmatpush1.msra.mxu0 0.0
    %105 = vmatprep.subr.mxu0 0.0
    %106 = vmatpush1.msra.mxu0 0.0
    %107 = vmatprep.subr.mxu0 0.0
    %108 = vmatpush1.msra.mxu0 0.0
    %109 = vmatprep.subr.mxu0 0.0
    %110 = vmatpush1.msra.mxu0 0.0
    %111 = vmatprep.subr.mxu0 0.0
    %112 = vmatpush1.msra.mxu0 0.0
    %113 = vmatprep.subr.mxu0 0.0
    %114 = vmatpush1.msra.mxu0 0.0
    %115 = vmatprep.subr.mxu0 0.0
    %116 = vmatpush1.msra.mxu0 0.0
    %117 = vmatprep.subr.mxu0 0.0
    %118 = vmatpush1.msra.mxu0 0.0
    %119 = vmatprep.mubr.f32.mxu0 0.0
    %120 = vmatmul.mubr.f32.gmra.mrb[0].mxu0 %v38
    %v121 = vpop.f32.mrb[0].mxu0
    %v122 = vadd.f32 0.0, %v121
    %v123 = vpop.f32.mrb[0].mxu0
    %124 = vdwg.mxu0
    %125 = vst [vmem:[#allocation7] sm:$0xff] %v122
    // Predicated region
    $region18: #{tpu_custom_call.1} parent=1 // pred_check
      _
    $region19: #{tpu_custom_call.1} parent=1 // pred_check_branch
      %127 = sbr.rel (0) target = $region21
    $region20: #{tpu_custom_call.1} parent=1 // pred_region
      %s129 = ssub.s32 128, 128
      %130 = vsyncadd [#allocation4], %s129
      %s132 = sshll.u32 [#allocation7], 4
      %s133 = int_to_ptr.vmem [resolvable:$true] %s132
      %135 = dma.vmem_to_hbm [thread:$0]  %s133, 128, %s2, [#allocation4]
    $region21: #{tpu_custom_call.1} parent=1 // pred_fallthru
      _
    // Predicated region
    $region22: #{tpu_custom_call.1} parent=1 // pred_check
      _
    $region23: #{tpu_custom_call.1} parent=1 // pred_check_branch
      %137 = sbr.rel (0) target = $region25
    $region24: #{tpu_custom_call.1} parent=1 // pred_region
      %138 = dma.done [#allocation4], 128
    $region25: #{tpu_custom_call.1} parent=1 // pred_fallthru
      _
    %139 = vsyncpa [#allocation3], 1
    %140 = vsyncpa [#allocation6], 1
    %141 = vsyncpa [#allocation4], 1

// kernel: tpu_custom_call.1
$region0: #{tpu_custom_call.1}
  #allocation0 [shape = 'u32[]', space=smem, size = 0x4, offset = 0x4, fixed_abs, tag = 'smem constant byte address 0x4 - core index']
  #allocation1 [shape = 'u32[144,128]{1,0:T(1,128)}', space=vmem, size = 0x12000, scoped, tag = 'internal scratch']
  %s0 = inlined_call_operand.hbm [shape: f32[16,32], index: 0, kind: input, shape index: {}]
  %s1 = inlined_call_operand.hbm [shape: f32[32,32], index: 1, kind: input, shape index: {}]
  %s2 = inlined_call_operand.vmem [shape: f32[1,32], index: 2, kind: input, shape index: {}]
  %s3 = inlined_call_operand.hbm [shape: f32[32,32], index: 3, kind: input, shape index: {}]
  %s4 = inlined_call_operand.vmem [shape: f32[1,32], index: 4, kind: input, shape index: {}]
  %s5 = inlined_call_operand.hbm [shape: f32[16,32], index: 5, kind: output, shape index: {}]
  %s6 = sld [smem:[#allocation0]]
  $region65: #{tpu_custom_call.1} parent=0
    _
  %s8 = ssub.s32 1, %s6
  %s9 = scalar_select 0, %s8, %s6
  $region1: #{tpu_custom_call.1} parent=0
    #allocation2 [shape = 'u8[8192]{0}', space=vmem, size = 0x2000, scoped, tag = 'input window, operand 0']
    #allocation3 [shape = 's32[2]{0}', space=sflag, size = 0x8, scoped, tag = 'scoped memory for tpu_custom_call.1']
    #allocation4 [shape = 's32[2]{0}', space=sflag, size = 0x8, scoped, tag = 'scoped memory for tpu_custom_call.1']
    #allocation5 [shape = 'u8[16384]{0}', space=vmem, size = 0x4000, scoped, tag = 'input window, operand 1, single buffered']
    #allocation6 [shape = 's32[1]{0}', space=sflag, size = 0x4, scoped, tag = 'scoped memory for tpu_custom_call.1']
    #allocation7 [shape = 'u8[16384]{0}', space=vmem, size = 0x4000, scoped, tag = 'input window, operand 3, single buffered']
    #allocation8 [shape = 'u8[8192]{0}', space=vmem, size = 0x2000, scoped, tag = 'output window, operand 0']
    %10 = vsyncpa [#allocation3], 0
    %s11 = scalar_lea.sflag [#allocation3], 1
    %12 = vsyncpa %s11, 0
    %13 = vsyncpa [#allocation6], 0
    %14 = vsyncpa [#allocation4], 0
    %s15 = scalar_lea.sflag [#allocation4], 1
    %16 = vsyncpa %s15, 0
    loop: start=0, step=1, limit=4
    $region2: #{tpu_custom_call.1} parent=1 // loop_pre_header
      _
    $region3: #{tpu_custom_call.1} parent=1 // loop_header
      %s18 = sphi 0, %s22
      %p19 = scmp.ge.s32.totalorder %s18, 4
      %s28 = sphi 0, %s30
      %s31 = sphi 0, %s28
      %s32 = sphi 0, %s31
      %s48 = sphi 0, %s32
      %s52 = sphi 0, %s52
      %s54 = sphi 0, %s52
      %s55 = sphi 0, %s54
      %s69 = sphi 0, %s55
      %s73 = sphi 0, %s73
      %s75 = sphi 0, %s73
      %s76 = sphi 0, %s75
      %s90 = sphi 0, %s76
      %s94 = sphi 0, %s94
      %s96 = sphi 0, %s94
      %s97 = sphi 0, %s96
      %s111 = sphi 0, %s97
      %s115 = sphi 0, %s115
      %s117 = sphi 0, %s115
      %s118 = sphi 0, %s117
      %s132 = sphi 0, %s118
      %s138 = sphi 0, %s140
      %s141 = sphi 0, %s138
      %s142 = sphi 0, %s141
      %s158 = sphi 0, %s142
    $region4: #{tpu_custom_call.1} parent=1 // loop_header_branch
      %21 = sbr.rel (%p19) target = $region8
    $region5: #{tpu_custom_call.1} parent=1 // loop_body
      %s23 = ssub.s32 %s18, 1
      %s24 = ssub.s32 %s18, 2
      %s25 = sadd.s32 %s18, 1
      %s26 = ssub.s32 %s18, %s25
      %p27 = scmp.eq.s32.totalorder %s26, 0
      %s29 = sadd.s32 %s28, 1
      %s30 = scalar_select %p27, %s28, %s29
      %p33 = pneg %p27
      %p34 = scmp.eq.s32.totalorder %s18, 1
      %p35 = por %p33, %p34
      %p36 = scmp.ne.s32.totalorder %s28, %s31
      %p37 = scmp.eq.s32.totalorder %s18, 0
      %p38 = por %p36, %p37
      %p39 = scmp.ne.s32.totalorder %s28, %s31
      %p40 = scmp.eq.s32.totalorder %s23, 1
      %p41 = por %p39, %p40
      %p42 = scmp.ne.s32.totalorder %s31, %s32
      %p43 = scmp.eq.s32.totalorder %s23, 0
      %p44 = por %p42, %p43
      %p45 = scmp.ne.s32.totalorder %s31, %s32
      %p46 = scmp.eq.s32.totalorder %s24, 1
      %p47 = por %p45, %p46
      %p49 = scmp.ne.s32.totalorder %s32, %s48
      %p50 = scmp.eq.s32.totalorder %s24, 0
      %p51 = por %p49, %p50
      %s53 = sadd.s32 %s52, 1
      %p56 = scmp.eq.s32.totalorder %s18, 1
      %p57 = scmp.ne.s32.totalorder %s52, %s54
      %p58 = scmp.eq.s32.totalorder %s18, 0
      %p59 = por %p57, %p58
      %p60 = scmp.ne.s32.totalorder %s52, %s54
      %p61 = scmp.eq.s32.totalorder %s23, 1
      %p62 = por %p60, %p61
      %p63 = scmp.ne.s32.totalorder %s54, %s55
      %p64 = scmp.eq.s32.totalorder %s23, 0
      %p65 = por %p63, %p64
      %p66 = scmp.ne.s32.totalorder %s54, %s55
      %p67 = scmp.eq.s32.totalorder %s24, 1
      %p68 = por %p66, %p67
      %p70 = scmp.ne.s32.totalorder %s55, %s69
      %p71 = scmp.eq.s32.totalorder %s24, 0
      %p72 = por %p70, %p71
      %s74 = sadd.s32 %s73, 1
      %p77 = scmp.eq.s32.totalorder %s18, 1
      %p78 = scmp.ne.s32.totalorder %s73, %s75
      %p79 = scmp.eq.s32.totalorder %s18, 0
      %p80 = por %p78, %p79
      %p81 = scmp.ne.s32.totalorder %s73, %s75
      %p82 = scmp.eq.s32.totalorder %s23, 1
      %p83 = por %p81, %p82
      %p84 = scmp.ne.s32.totalorder %s75, %s76
      %p85 = scmp.eq.s32.totalorder %s23, 0
      %p86 = por %p84, %p85
      %p87 = scmp.ne.s32.totalorder %s75, %s76
      %p88 = scmp.eq.s32.totalorder %s24, 1
      %p89 = por %p87, %p88
      %p91 = scmp.ne.s32.totalorder %s76, %s90
      %p92 = scmp.eq.s32.totalorder %s24, 0
      %p93 = por %p91, %p92
      %s95 = sadd.s32 %s94, 1
      %p98 = scmp.eq.s32.totalorder %s18, 1
      %p99 = scmp.ne.s32.totalorder %s94, %s96
      %p100 = scmp.eq.s32.totalorder %s18, 0
      %p101 = por %p99, %p100
      %p102 = scmp.ne.s32.totalorder %s94, %s96
      %p103 = scmp.eq.s32.totalorder %s23, 1
      %p104 = por %p102, %p103
      %p105 = scmp.ne.s32.totalorder %s96, %s97
      %p106 = scmp.eq.s32.totalorder %s23, 0
      %p107 = por %p105, %p106
      %p108 = scmp.ne.s32.totalorder %s96, %s97
      %p109 = scmp.eq.s32.totalorder %s24, 1
      %p110 = por %p108, %p109
      %p112 = scmp.ne.s32.totalorder %s97, %s111
      %p113 = scmp.eq.s32.totalorder %s24, 0
      %p114 = por %p112, %p113
      %s116 = sadd.s32 %s115, 1
      %p119 = scmp.eq.s32.totalorder %s18, 1
      %p120 = scmp.ne.s32.totalorder %s115, %s117
      %p121 = scmp.eq.s32.totalorder %s18, 0
      %p122 = por %p120, %p121
      %p123 = scmp.ne.s32.totalorder %s115, %s117
      %p124 = scmp.eq.s32.totalorder %s23, 1
      %p125 = por %p123, %p124
      %p126 = scmp.ne.s32.totalorder %s117, %s118
      %p127 = scmp.eq.s32.totalorder %s23, 0
      %p128 = por %p126, %p127
      %p129 = scmp.ne.s32.totalorder %s117, %s118
      %p130 = scmp.eq.s32.totalorder %s24, 1
      %p131 = por %p129, %p130
      %p133 = scmp.ne.s32.totalorder %s118, %s132
      %p134 = scmp.eq.s32.totalorder %s24, 0
      %p135 = por %p133, %p134
      %s136 = ssub.s32 %s18, %s25
      %p137 = scmp.eq.s32.totalorder %s136, 0
      %s139 = sadd.s32 %s138, 1
      %s140 = scalar_select %p137, %s138, %s139
      %p143 = pneg %p137
      %p144 = scmp.eq.s32.totalorder %s18, 1
      %p145 = por %p143, %p144
      %p146 = scmp.ne.s32.totalorder %s138, %s141
      %p147 = scmp.eq.s32.totalorder %s18, 0
      %p148 = por %p146, %p147
      %p149 = scmp.ne.s32.totalorder %s138, %s141
      %p150 = scmp.eq.s32.totalorder %s23, 1
      %p151 = por %p149, %p150
      %p152 = scmp.ne.s32.totalorder %s141, %s142
      %p153 = scmp.eq.s32.totalorder %s23, 0
      %p154 = por %p152, %p153
      %p155 = scmp.ne.s32.totalorder %s141, %s142
      %p156 = scmp.eq.s32.totalorder %s24, 1
      %p157 = por %p155, %p156
      %p159 = scmp.ne.s32.totalorder %s142, %s158
      %p160 = scmp.eq.s32.totalorder %s24, 0
      %p161 = por %p159, %p160
      %p162 = scmp.le.s32.totalorder 1, %s18
      %p163 = scmp.lt.s32.totalorder %s18, 3
      %p164 = pnand %p162, %p163
      %p165 = pneg %p164
      // Predicated region
      $region9: #{tpu_custom_call.1} parent=5 // pred_check
        _
      $region10: #{tpu_custom_call.1} parent=5 // pred_check_branch
        %167 = sbr.rel (%p164) target = $region12
      $region11: #{tpu_custom_call.1} parent=5 // pred_region
        %s168 = ssub.s32 %s18, 1
        // Predicated region
        $region13: #{tpu_custom_call.1} parent=11 // pred_check
          %p169 = pneg %p65
        $region14: #{tpu_custom_call.1} parent=11 // pred_check_branch
          %171 = sbr.rel (%p169) target = $region16
        $region15: #{tpu_custom_call.1} parent=11 // pred_region
          %s173 = ssub.s32 512, 512
          %174 = vsyncadd [#allocation6], %s173
          %s175 = sshll.u32 [#allocation5], 4
          %s176 = int_to_ptr.vmem [resolvable:$true] %s175
          %181 = dma.hbm_to_vmem [thread:$0]  %s1, 512, %s176, [#allocation6], 128, 128, 8
        $region16: #{tpu_custom_call.1} parent=11 // pred_fallthru
          _
        // Predicated region
        $region17: #{tpu_custom_call.1} parent=11 // pred_check
          %p182 = pneg %p86
        $region18: #{tpu_custom_call.1} parent=11 // pred_check_branch
          %184 = sbr.rel (%p182) target = $region20
        $region19: #{tpu_custom_call.1} parent=11 // pred_region
          _
        $region20: #{tpu_custom_call.1} parent=11 // pred_fallthru
          _
        // Predicated region
        $region21: #{tpu_custom_call.1} parent=11 // pred_check
          %p185 = pneg %p107
        $region22: #{tpu_custom_call.1} parent=11 // pred_check_branch
          %187 = sbr.rel (%p185) target = $region24
        $region23: #{tpu_custom_call.1} parent=11 // pred_region
          %s189 = ssub.s32 512, 512
          %190 = vsyncadd [#allocation6], %s189
          %s191 = sshll.u32 [#allocation7], 4
          %s192 = int_to_ptr.vmem [resolvable:$true] %s191
          %197 = dma.hbm_to_vmem [thread:$0]  %s3, 512, %s192, [#allocation6], 128, 128, 8
        $region24: #{tpu_custom_call.1} parent=11 // pred_fallthru
          _
        // Predicated region
        $region25: #{tpu_custom_call.1} parent=11 // pred_check
          %p198 = pneg %p128
        $region26: #{tpu_custom_call.1} parent=11 // pred_check_branch
          %200 = sbr.rel (%p198) target = $region28
        $region27: #{tpu_custom_call.1} parent=11 // pred_region
          _
        $region28: #{tpu_custom_call.1} parent=11 // pred_fallthru
          _
      $region12: #{tpu_custom_call.1} parent=5 // pred_fallthru
        _
      %p201 = scmp.lt.s32.totalorder %s18, 2
      // Predicated region
      $region29: #{tpu_custom_call.1} parent=5 // pred_check
        %p202 = pneg %p201
      $region30: #{tpu_custom_call.1} parent=5 // pred_check_branch
        %204 = sbr.rel (%p202) target = $region32
      $region31: #{tpu_custom_call.1} parent=5 // pred_region
        // Predicated region
        $region33: #{tpu_custom_call.1} parent=31 // pred_check
          %p205 = pneg %p38
        $region34: #{tpu_custom_call.1} parent=31 // pred_check_branch
          %207 = sbr.rel (%p205) target = $region36
        $region35: #{tpu_custom_call.1} parent=31 // pred_region
          %s208 = sand.u32 %s28, 1
          %s209 = scalar_lea.sflag [#allocation3], %s208
          %s210 = sand.u32 %s28, 1
          %s211 = smul.addr %s210, 8
          %s212 = scalar_lea.vmem [#allocation2], %s211
          %s214 = ssub.s32 128, 128
          %215 = vsyncadd %s209, %s214
          %s216 = smul.addr %s18, 128
          %s217 = scalar_lea.hbm %s0, %s216
          %s219 = sshll.u32 %s212, 4
          %s220 = int_to_ptr.vmem [resolvable:$true] %s219
          %222 = dma.hbm_to_vmem [thread:$0]  %s217, 128, %s220, %s209
        $region36: #{tpu_custom_call.1} parent=31 // pred_fallthru
          _
      $region32: #{tpu_custom_call.1} parent=5 // pred_fallthru
        _
      %p223 = scmp.le.s32.totalorder 1, %s18
      %p224 = scmp.lt.s32.totalorder %s18, 3
      %p225 = pnand %p223, %p224
      %p226 = pneg %p225
      // Predicated region
      $region37: #{tpu_custom_call.1} parent=5 // pred_check
        _
      $region38: #{tpu_custom_call.1} parent=5 // pred_check_branch
        %228 = sbr.rel (%p225) target = $region40
      $region39: #{tpu_custom_call.1} parent=5 // pred_region
        %s229 = ssub.s32 %s18, 1
        %s230 = sand.u32 %s31, 1
        %s231 = scalar_lea.sflag [#allocation3], %s230
        %s232 = sand.u32 %s31, 1
        %s233 = smul.addr %s232, 8
        %s234 = scalar_lea.vmem [#allocation2], %s233
        // Predicated region
        $region41: #{tpu_custom_call.1} parent=39 // pred_check
          %p235 = pneg %p44
        $region42: #{tpu_custom_call.1} parent=39 // pred_check_branch
          %237 = sbr.rel (%p235) target = $region44
        $region43: #{tpu_custom_call.1} parent=39 // pred_region
          %238 = dma.done %s231, 128
        $region44: #{tpu_custom_call.1} parent=39 // pred_fallthru
          _
        // Predicated region
        $region45: #{tpu_custom_call.1} parent=39 // pred_check
          %p239 = pneg %p65
        $region46: #{tpu_custom_call.1} parent=39 // pred_check_branch
          %241 = sbr.rel (%p239) target = $region48
        $region47: #{tpu_custom_call.1} parent=39 // pred_region
          %242 = dma.done [#allocation6], 512
        $region48: #{tpu_custom_call.1} parent=39 // pred_fallthru
          _
        // Predicated region
        $region49: #{tpu_custom_call.1} parent=39 // pred_check
          %p243 = pneg %p107
        $region50: #{tpu_custom_call.1} parent=39 // pred_check_branch
          %245 = sbr.rel (%p243) target = $region52
        $region51: #{tpu_custom_call.1} parent=39 // pred_region
          %246 = dma.done [#allocation6], 512
        $region52: #{tpu_custom_call.1} parent=39 // pred_fallthru
          _
        %s247 = sand.u32 %s31, 1
        %s248 = scalar_lea.sflag [#allocation3], %s247
        %s249 = sand.u32 %s31, 1
        %s250 = smul.addr %s249, 8
        %s251 = scalar_lea.vmem [#allocation2], %s250
        %p252 = pneg %p44
        %p253 = pneg %p41
        %p254 = pneg %p65
        %p255 = pneg %p62
        %p256 = pneg %p86
        %p257 = pneg %p83
        %p258 = pneg %p107
        %p259 = pneg %p104
        %p260 = pneg %p128
        %p261 = pneg %p125
        %p262 = pneg %p154
        %p263 = pneg %p151
        %s264 = sand.u32 %s141, 1
        %s265 = scalar_lea.sflag [#allocation4], %s264
        %s266 = sand.u32 %s141, 1
        %s267 = smul.addr %s266, 8
        %s268 = scalar_lea.vmem [#allocation8], %s267
        %v269 = vld [vmem:[%s234] sm:$0xff]
        %v270 = vld [vmem:[#allocation5] sm:$0xff]
        %v271 = vld [vmem:[#allocation5 + $0x8] sm:$0xff]
        %v272 = vld [vmem:[#allocation5 + $0x10] sm:$0xff]
        %v273 = vld [vmem:[#allocation5 + $0x18] sm:$0xff]
        %v274 = vld [vmem:[%s2] sm:$0x1]
        %v276 = vlaneseq
        %v277 = vshrl.u32 %v276, 7
        %v278 = vsub.s32 0, %v277
        %v279 = vrot.slane %v274, %v278
        %vm281 = vcmask 261120
        %v283 = vsel %vm281, %v269, 0
        %285 = vmatprep.subr.mxu0 0.0
        %286 = vmatpush1.msra.mxu0 %v270
        %287 = vmatprep.subr.mxu0 0.0
        %288 = vmatpush1.msra.mxu0 %v271
        %289 = vmatprep.subr.mxu0 0.0
        %290 = vmatpush1.msra.mxu0 %v272
        %291 = vmatprep.subr.mxu0 0.0
        %292 = vmatpush1.msra.mxu0 %v273
        %293 = vmatprep.subr.mxu0 0.0
        %294 = vmatpush1.msra.mxu0 0.0
        %295 = vmatprep.subr.mxu0 0.0
        %296 = vmatpush1.msra.mxu0 0.0
        %297 = vmatprep.subr.mxu0 0.0
        %298 = vmatpush1.msra.mxu0 0.0
        %299 = vmatprep.subr.mxu0 0.0
        %300 = vmatpush1.msra.mxu0 0.0
        %301 = vmatprep.subr.mxu0 0.0
        %302 = vmatpush1.msra.mxu0 0.0
        %303 = vmatprep.subr.mxu0 0.0
        %304 = vmatpush1.msra.mxu0 0.0
        %305 = vmatprep.subr.mxu0 0.0
        %306 = vmatpush1.msra.mxu0 0.0
        %307 = vmatprep.subr.mxu0 0.0
        %308 = vmatpush1.msra.mxu0 0.0
        %309 = vmatprep.subr.mxu0 0.0
        %310 = vmatpush1.msra.mxu0 0.0
        %311 = vmatprep.subr.mxu0 0.0
        %312 = vmatpush1.msra.mxu0 0.0
        %313 = vmatprep.subr.mxu0 0.0
        %314 = vmatpush1.msra.mxu0 0.0
        %315 = vmatprep.subr.mxu0 0.0
        %316 = vmatpush1.msra.mxu0 0.0
        %317 = vmatprep.subr.mxu0 0.0
        %318 = vmatpush1.msra.mxu0 0.0
        %319 = vmatprep.subr.mxu0 0.0
        %320 = vmatpush1.msra.mxu0 0.0
        %321 = vmatprep.subr.mxu0 0.0
        %322 = vmatpush1.msra.mxu0 0.0
        %323 = vmatprep.subr.mxu0 0.0
        %324 = vmatpush1.msra.mxu0 0.0
        %325 = vmatprep.subr.mxu0 0.0
        %326 = vmatpush1.msra.mxu0 0.0
        %327 = vmatprep.subr.mxu0 0.0
        %328 = vmatpush1.msra.mxu0 0.0
        %329 = vmatprep.subr.mxu0 0.0
        %330 = vmatpush1.msra.mxu0 0.0
        %331 = vmatprep.subr.mxu0 0.0
        %332 = vmatpush1.msra.mxu0 0.0
        %333 = vmatprep.subr.mxu0 0.0
        %334 = vmatpush1.msra.mxu0 0.0
        %335 = vmatprep.subr.mxu0 0.0
        %336 = vmatpush1.msra.mxu0 0.0
        %337 = vmatprep.subr.mxu0 0.0
        %338 = vmatpush1.msra.mxu0 0.0
        %339 = vmatprep.subr.mxu0 0.0
        %340 = vmatpush1.msra.mxu0 0.0
        %341 = vmatprep.subr.mxu0 0.0
        %342 = vmatpush1.msra.mxu0 0.0
        %343 = vmatprep.subr.mxu0 0.0
        %344 = vmatpush1.msra.mxu0 0.0
        %345 = vmatprep.subr.mxu0 0.0
        %346 = vmatpush1.msra.mxu0 0.0
        %347 = vmatprep.subr.mxu0 0.0
        %348 = vmatpush1.msra.mxu0 0.0
        %349 = vmatprep.mubr.f32.mxu0 0.0
        %350 = vmatmul.mubr.f32.gmra.mrb[0].mxu0 %v283
        %v351 = vpop.f32.mrb[0].mxu0
        %v352 = vadd.f32 %v279, %v351
        %v353 = vpop.f32.mrb[0].mxu0
        %354 = vdwg.mxu0
        %v355 = vmax.f32 %v352, 0.0
        %v356 = vld [vmem:[#allocation7] sm:$0xff]
        %v357 = vld [vmem:[#allocation7 + $0x8] sm:$0xff]
        %v358 = vld [vmem:[#allocation7 + $0x10] sm:$0xff]
        %v359 = vld [vmem:[#allocation7 + $0x18] sm:$0xff]
        %v360 = vld [vmem:[%s4] sm:$0x1]
        %v362 = vlaneseq
        %v363 = vshrl.u32 %v362, 7
        %v364 = vsub.s32 0, %v363
        %v365 = vrot.slane %v360, %v364
        %v368 = vsel %vm281, %v355, 0
        %370 = vmatprep.subr.mxu0 0.0
        %371 = vmatpush1.msra.mxu0 %v356
        %372 = vmatprep.subr.mxu0 0.0
        %373 = vmatpush1.msra.mxu0 %v357
        %374 = vmatprep.subr.mxu0 0.0
        %375 = vmatpush1.msra.mxu0 %v358
        %376 = vmatprep.subr.mxu0 0.0
        %377 = vmatpush1.msra.mxu0 %v359
        %378 = vmatprep.subr.mxu0 0.0
        %379 = vmatpush1.msra.mxu0 0.0
        %380 = vmatprep.subr.mxu0 0.0
        %381 = vmatpush1.msra.mxu0 0.0
        %382 = vmatprep.subr.mxu0 0.0
        %383 = vmatpush1.msra.mxu0 0.0
        %384 = vmatprep.subr.mxu0 0.0
        %385 = vmatpush1.msra.mxu0 0.0
        %386 = vmatprep.subr.mxu0 0.0
        %387 = vmatpush1.msra.mxu0 0.0
        %388 = vmatprep.subr.mxu0 0.0
        %389 = vmatpush1.msra.mxu0 0.0
        %390 = vmatprep.subr.mxu0 0.0
        %391 = vmatpush1.msra.mxu0 0.0
        %392 = vmatprep.subr.mxu0 0.0
        %393 = vmatpush1.msra.mxu0 0.0
        %394 = vmatprep.subr.mxu0 0.0
        %395 = vmatpush1.msra.mxu0 0.0
        %396 = vmatprep.subr.mxu0 0.0
        %397 = vmatpush1.msra.mxu0 0.0
        %398 = vmatprep.subr.mxu0 0.0
        %399 = vmatpush1.msra.mxu0 0.0
        %400 = vmatprep.subr.mxu0 0.0
        %401 = vmatpush1.msra.mxu0 0.0
        %402 = vmatprep.subr.mxu0 0.0
        %403 = vmatpush1.msra.mxu0 0.0
        %404 = vmatprep.subr.mxu0 0.0
        %405 = vmatpush1.msra.mxu0 0.0
        %406 = vmatprep.subr.mxu0 0.0
        %407 = vmatpush1.msra.mxu0 0.0
        %408 = vmatprep.subr.mxu0 0.0
        %409 = vmatpush1.msra.mxu0 0.0
        %410 = vmatprep.subr.mxu0 0.0
        %411 = vmatpush1.msra.mxu0 0.0
        %412 = vmatprep.subr.mxu0 0.0
        %413 = vmatpush1.msra.mxu0 0.0
        %414 = vmatprep.subr.mxu0 0.0
        %415 = vmatpush1.msra.mxu0 0.0
        %416 = vmatprep.subr.mxu0 0.0
        %417 = vmatpush1.msra.mxu0 0.0
        %418 = vmatprep.subr.mxu0 0.0
        %419 = vmatpush1.msra.mxu0 0.0
        %420 = vmatprep.subr.mxu0 0.0
        %421 = vmatpush1.msra.mxu0 0.0
        %422 = vmatprep.subr.mxu0 0.0
        %423 = vmatpush1.msra.mxu0 0.0
        %424 = vmatprep.subr.mxu0 0.0
        %425 = vmatpush1.msra.mxu0 0.0
        %426 = vmatprep.subr.mxu0 0.0
        %427 = vmatpush1.msra.mxu0 0.0
        %428 = vmatprep.subr.mxu0 0.0
        %429 = vmatpush1.msra.mxu0 0.0
        %430 = vmatprep.subr.mxu0 0.0
        %431 = vmatpush1.msra.mxu0 0.0
        %432 = vmatprep.subr.mxu0 0.0
        %433 = vmatpush1.msra.mxu0 0.0
        %434 = vmatprep.mubr.f32.mxu0 0.0
        %435 = vmatmul.mubr.f32.gmra.mrb[0].mxu0 %v368
        %v436 = vpop.f32.mrb[0].mxu0
        %v437 = vadd.f32 %v365, %v436
        %v438 = vpop.f32.mrb[0].mxu0
        %439 = vdwg.mxu0
        %440 = vst.msk [vmem:[%s268] sm:$0xff] %vm281, %v437
        %s441 = sand.u32 %s141, 1
        %s442 = scalar_lea.sflag [#allocation4], %s441
        %s443 = sand.u32 %s141, 1
        %s444 = smul.addr %s443, 8
        %s445 = scalar_lea.vmem [#allocation8], %s444
        // Predicated region
        $region53: #{tpu_custom_call.1} parent=39 // pred_check
          %p446 = pneg %p151
        $region54: #{tpu_custom_call.1} parent=39 // pred_check_branch
          %448 = sbr.rel (%p446) target = $region56
        $region55: #{tpu_custom_call.1} parent=39 // pred_region
          %s450 = ssub.s32 128, 128
          %451 = vsyncadd %s442, %s450
          %s452 = smul.addr %s23, 128
          %s453 = scalar_lea.hbm %s5, %s452
          %s455 = sshll.u32 %s445, 4
          %s456 = int_to_ptr.vmem [resolvable:$true] %s455
          %458 = dma.vmem_to_hbm [thread:$0]  %s456, 128, %s453, %s442
        $region56: #{tpu_custom_call.1} parent=39 // pred_fallthru
          _
      $region40: #{tpu_custom_call.1} parent=5 // pred_fallthru
        _
      %p459 = scmp.le.s32.totalorder 2, %s18
      // Predicated region
      $region57: #{tpu_custom_call.1} parent=5 // pred_check
        %p460 = pneg %p459
      $region58: #{tpu_custom_call.1} parent=5 // pred_check_branch
        %462 = sbr.rel (%p460) target = $region60
      $region59: #{tpu_custom_call.1} parent=5 // pred_region
        %s463 = ssub.s32 %s18, 2
        // Predicated region
        $region61: #{tpu_custom_call.1} parent=59 // pred_check
          %p464 = pneg %p157
        $region62: #{tpu_custom_call.1} parent=59 // pred_check_branch
          %466 = sbr.rel (%p464) target = $region64
        $region63: #{tpu_custom_call.1} parent=59 // pred_region
          %s467 = sand.u32 %s142, 1
          %s468 = scalar_lea.sflag [#allocation4], %s467
          %s469 = sand.u32 %s142, 1
          %s470 = smul.addr %s469, 8
          %s471 = scalar_lea.vmem [#allocation8], %s470
          %472 = dma.done %s468, 128
        $region64: #{tpu_custom_call.1} parent=59 // pred_fallthru
          _
      $region60: #{tpu_custom_call.1} parent=5 // pred_fallthru
        _
    $region6: #{tpu_custom_call.1} parent=1 // loop_footer
      %s22 = sadd.s32 1, %s18
    $region7: #{tpu_custom_call.1} parent=1 // loop_footer_branch
      %17 = sbr.rel target = $region3
    $region8: #{tpu_custom_call.1} parent=1 // loop_exit
      _
    %473 = vsyncpa [#allocation3], 1
    %s474 = scalar_lea.sflag [#allocation3], 1
    %475 = vsyncpa %s474, 1
    %476 = vsyncpa [#allocation6], 1
    %477 = vsyncpa [#allocation4], 1
    %s478 = scalar_lea.sflag [#allocation4], 1
    %479 = vsyncpa %s478, 1

</llo_original>
